<compile_context>
chip_gen: v7x
topology: tpu7x:2x2x1
jax: 0.10.0
libtpu: 0.0.40
codegen_flags: <defaults>
</compile_context>

<pallas_src>
import functools

import jax
import jax.numpy as jnp
from jax.experimental import pallas as pl
from jax.experimental.pallas import tpu as pltpu


def _round_up(x, m):
    return (x + m - 1) // m * m


def _init_layer_kernel(noise_ref, w_ref, shift_ref, o_ref, *, bf16_epilogue):
    # noise_ref: (bm, nz)          f32    (tile of noise rows; cast in-kernel)
    # w_ref:     (nz, 2*half_pad)  bf16   (BN-scale-folded ConvTranspose2d weight)
    # shift_ref: (1, 2*half_pad)   f32    (folded bias/BN shift, per column)
    # o_ref:     (bm, half_pad)    out_dtype
    x = noise_ref[...].astype(w_ref.dtype)               # cast inside the kernel
    y = jnp.dot(x, w_ref[...], preferred_element_type=jnp.float32)
    y = y + shift_ref[...]                                # f32 affine
    if bf16_epilogue:                                     # v6e/v7x: bf16 VPU/EUP
        y = y.astype(jnp.bfloat16)
    half = y.shape[1] // 2
    x1 = y[:, :half]
    x2 = y[:, half:]
    o_ref[...] = (x1 * jax.nn.sigmoid(x2)).astype(o_ref.dtype)


def prepare_init_layer_params(weight, bias, bn_gamma, bn_beta, bn_mean, bn_var,
                              eps=1e-5, compute_dtype=jnp.bfloat16):
    """One-time parameter preparation (do NOT call per forward).

    weight: (nz, 2C, 4, 4) ConvTranspose2d weight.
    Returns (w_folded, shift, meta). Column layout: col = o*hw + h*kw + w, each
    GLU half padded to a multiple of 128 lanes so the in-kernel split is
    lane-tile aligned (zero-cost for the default C*16 = 256 config).
    """
    nz, two_c, kh, kw = weight.shape
    C = two_c // 2
    hw = kh * kw
    half = C * hw
    half_pad = _round_up(half, 128)
    pad = half_pad - half

    # Fold bias + BatchNorm (eval mode) into a per-column affine.
    inv_std = 1.0 / jnp.sqrt(bn_var.astype(jnp.float32) + eps)            # (2C,)
    ch_scale = bn_gamma.astype(jnp.float32) * inv_std                     # (2C,)
    ch_shift = (bias.astype(jnp.float32) - bn_mean.astype(jnp.float32)) \
        * ch_scale + bn_beta.astype(jnp.float32)                          # (2C,)

    w_flat = weight.reshape(nz, two_c * hw).astype(jnp.float32)           # (nz, 2C*hw)
    scale_cols = jnp.repeat(ch_scale, hw)                                 # (2C*hw,)
    shift_cols = jnp.repeat(ch_shift, hw)                                 # (2C*hw,)

    # Fold the scale into the weight once; only the shift survives as a vector.
    w_folded = w_flat * scale_cols[None, :]

    if pad:
        w1 = jnp.pad(w_folded[:, :half], ((0, 0), (0, pad)))
        w2 = jnp.pad(w_folded[:, half:], ((0, 0), (0, pad)))
        w_folded = jnp.concatenate([w1, w2], axis=1)
        s1 = jnp.pad(shift_cols[:half], (0, pad))
        s2 = jnp.pad(shift_cols[half:], (0, pad))
        shift_cols = jnp.concatenate([s1, s2])

    w_folded = w_folded.astype(compute_dtype)                             # (nz, 2*half_pad)
    shift = shift_cols.reshape(1, -1).astype(jnp.float32)                 # (1, 2*half_pad)
    meta = (C, kh, kw, half, half_pad)
    return w_folded, shift, meta


def _device_flags():
    kind = ""
    try:
        kind = jax.devices()[0].device_kind.lower()
    except Exception:
        pass
    two_tc = "v7" in kind          # v7x: 2 TensorCores per chip
    bf16_epi = "v5" not in kind    # v5e has no bf16 VPU/EUP path
    return two_tc, bf16_epi


def _pick_bm(B, two_tc):
    if B <= 8:
        return B                                    # single (full-dim) block
    if two_tc and B >= 128:
        # Ensure >= 2 grid steps so both TensorCores get work on v7x.
        return min(512, _round_up(pl.cdiv(B, 2), 8))
    if B <= 512:
        return B                                    # one block, one grid step
    return 512                                      # ~85% HBM roofline tiles


def init_layer_forward_flat(noise, w_folded, shift, meta, *,
                            out_dtype=jnp.bfloat16, min_pallas_batch=17,
                            bf16_epilogue=None):
    """noise: (B, nz) or (B, nz, 1, 1).

    Returns the lane-dense slab (B, half_pad); columns [:half] are the valid
    GLU output flattened as (C, 4, 4) row-major. Prefer feeding this directly
    to the next block and only reshaping to NCHW at the true module boundary.
    """
    C, kh, kw, half, half_pad = meta
    del C, kh, kw
    B = noise.shape[0]
    noise2d = noise.reshape(B, -1)                   # view(B, -1, 1, 1); stays f32
    nz = noise2d.shape[1]
    n_cols = w_folded.shape[1]                       # 2 * half_pad

    two_tc, bf16_epi_default = _device_flags()
    if bf16_epilogue is None:
        bf16_epilogue = bf16_epi_default

    if B < min_pallas_batch:
        # Tiny-batch fast path: a pallas_call launch dwarfs ~KFLOPs of work.
        y = jnp.dot(noise2d.astype(w_folded.dtype), w_folded,
                    preferred_element_type=jnp.float32) + shift
        x1, x2 = y[:, :half_pad], y[:, half_pad:]
        return (x1 * jax.nn.sigmoid(x2)).astype(out_dtype)

    bm = _pick_bm(B, two_tc)
    grid = (pl.cdiv(B, bm),)                         # partial last block handled by Pallas

    kernel = functools.partial(_init_layer_kernel, bf16_epilogue=bf16_epilogue)
    return pl.pallas_call(
        kernel,
        out_shape=jax.ShapeDtypeStruct((B, half_pad), out_dtype),
        grid=grid,
        in_specs=[
            pl.BlockSpec((bm, nz), lambda i: (i, 0)),        # stream noise rows (f32)
            pl.BlockSpec((nz, n_cols), lambda i: (0, 0)),    # weight resident in VMEM
            pl.BlockSpec((1, n_cols), lambda i: (0, 0)),     # shift resident in VMEM
        ],
        out_specs=pl.BlockSpec((bm, half_pad), lambda i: (i, 0)),
        compiler_params=pltpu.CompilerParams(
            dimension_semantics=("parallel",)),              # v7x: shard B over both TCs
    )(noise2d, w_folded, shift)


def init_layer_forward(noise, w_folded, shift, meta, **kwargs):
    """Module-boundary wrapper: returns NCHW (B, C, 4, 4)."""
    C, kh, kw, half, half_pad = meta
    flat = init_layer_forward_flat(noise, w_folded, shift, meta, **kwargs)
    B = flat.shape[0]
    if half_pad != half:                             # no-op copy skipped when 128-aligned
        flat = flat[:, :half]
    return flat.reshape(B, C, kh, kw)


def _reference_forward(noise, weight, bias, bn_gamma, bn_beta, bn_mean, bn_var,
                       eps=1e-5):
    """Plain-JAX f32 reference mirroring the PyTorch module (eval-mode BN)."""
    B = noise.shape[0]
    n2 = noise.reshape(B, -1)
    nz, two_c, kh, kw = weight.shape
    # ConvTranspose2d with 1x1 input == matmul over input channels.
    y = jnp.einsum('bi,iohw->bohw', n2, weight) + bias[None, :, None, None]
    # BatchNorm2d eval
    y = (y - bn_mean[None, :, None, None]) / jnp.sqrt(
        bn_var[None, :, None, None] + eps)
    y = y * bn_gamma[None, :, None, None] + bn_beta[None, :, None, None]
    # GLU along channel dim
    c = two_c // 2
    x1, x2 = y[:, :c], y[:, c:]
    return x1 * jax.nn.sigmoid(x2)


if __name__ == "__main__":
    B, nz, channel = 2, 32, 16            # channel*2 = 32 output conv channels
    two_c, kh, kw = channel * 2, 4, 4

    key = jax.random.PRNGKey(0)
    k_noise, k_w, k_b, k_big = jax.random.split(key, 4)

    noise = jax.random.normal(k_noise, (B, nz), dtype=jnp.float32)
    # Deterministic parameter init (synthetic; shapes from ConvTranspose2d).
    weight = jax.random.normal(k_w, (nz, two_c, kh, kw), dtype=jnp.float32) * 0.05
    bias = jax.random.normal(k_b, (two_c,), dtype=jnp.float32) * 0.01
    # BatchNorm2d running stats (non-trivial to exercise the fold).
    bn_gamma = jnp.ones((two_c,), jnp.float32) * 1.1
    bn_beta = jnp.ones((two_c,), jnp.float32) * 0.02
    bn_mean = jnp.ones((two_c,), jnp.float32) * 0.01
    bn_var = jnp.ones((two_c,), jnp.float32) * 0.9

    # One-time parameter preparation (BN scale folded into the bf16 weight).
    w_folded, shift, meta = prepare_init_layer_params(
        weight, bias, bn_gamma, bn_beta, bn_mean, bn_var)

    ref = _reference_forward(noise, weight, bias,
                             bn_gamma, bn_beta, bn_mean, bn_var)

    # 1) Small-batch check through the Pallas kernel (force past the fast path).
    out = init_layer_forward(noise, w_folded, shift, meta, min_pallas_batch=0)
    out = jax.block_until_ready(out)
    assert out.shape == (B, channel, 4, 4), out.shape
    # bf16 matmul operands + bf16 output -> relaxed tolerance vs f32 reference.
    assert jnp.allclose(out.astype(jnp.float32), ref, atol=2e-2, rtol=2e-2), \
        float(jnp.max(jnp.abs(out.astype(jnp.float32) - ref)))

    # 2) Tiny-batch XLA fast path (default behaviour at B=2).
    out_fast = jax.block_until_ready(
        init_layer_forward(noise, w_folded, shift, meta))
    assert jnp.allclose(out_fast.astype(jnp.float32), ref, atol=2e-2, rtol=2e-2)

    # 3) Batched path: grid > 1, partial last block, weight resident in VMEM.
    B_big = 600
    noise_big = jax.random.normal(k_big, (B_big, nz), dtype=jnp.float32)
    out_big = init_layer_forward(noise_big, w_folded, shift, meta)
    out_big = jax.block_until_ready(out_big)
    ref_big = _reference_forward(noise_big, weight, bias,
                                 bn_gamma, bn_beta, bn_mean, bn_var)
    assert out_big.shape == (B_big, channel, 4, 4), out_big.shape
    assert jnp.allclose(out_big.astype(jnp.float32), ref_big,
                        atol=2e-2, rtol=2e-2), \
        float(jnp.max(jnp.abs(out_big.astype(jnp.float32) - ref_big)))

    print("KERNEL_OK")
</pallas_src>

<mosaic_0001>
module attributes {stable_mosaic.version = 11 : i64} {
  func.func @_init_layer_kernel(%arg0: i32, %arg1: memref<2x32xf32, #tpu.memory_space<vmem>>, %arg2: memref<32x512xbf16, #tpu.memory_space<vmem>>, %arg3: memref<1x512xf32, #tpu.memory_space<vmem>>, %arg4: memref<2x256xbf16, #tpu.memory_space<vmem>>) attributes {dimension_semantics = [#tpu.dimension_semantics<parallel>], iteration_bounds = array<i64: 1>, scalar_prefetch = 0 : i64, scratch_operands = 0 : i64, tpu.core_type = #tpu.core_type<tc>, window_params = [{transform_indices = @transform_0, window_bounds = array<i64: 2, 32>}, {pipeline_mode = #tpu.pipeline_mode<synchronous>, transform_indices = @transform_1, window_bounds = array<i64: 32, 512>}, {pipeline_mode = #tpu.pipeline_mode<synchronous>, transform_indices = @transform_2, window_bounds = array<i64: 1, 512>}, {transform_indices = @transform_3, window_bounds = array<i64: 2, 256>}]} {
    %c0 = arith.constant 0 : index
    %c0_0 = arith.constant 0 : index
    %0 = vector.load %arg1[%c0, %c0_0] : memref<2x32xf32, #tpu.memory_space<vmem>>, vector<2x32xf32>
    %1 = arith.truncf %0 : vector<2x32xf32> to vector<2x32xbf16>
    %c0_1 = arith.constant 0 : index
    %c0_2 = arith.constant 0 : index
    %2 = vector.load %arg2[%c0_1, %c0_2] : memref<32x512xbf16, #tpu.memory_space<vmem>>, vector<32x512xbf16>
    %cst = arith.constant dense<0.000000e+00> : vector<2x512xf32>
    %3 = tpu.matmul %1, %2, %cst {dimension_numbers = #tpu.dot_dimension_numbers<[1], [0], [0], [1], [0, 0, 1, 1], [], []>} : vector<2x32xbf16>, vector<32x512xbf16>, vector<2x512xf32> -> vector<2x512xf32>
    %c0_3 = arith.constant 0 : index
    %c0_4 = arith.constant 0 : index
    %4 = vector.load %arg3[%c0_3, %c0_4] : memref<1x512xf32, #tpu.memory_space<vmem>>, vector<1x512xf32>
    %5 = vector.broadcast %4 : vector<1x512xf32> to vector<2x512xf32>
    %6 = arith.addf %3, %5 : vector<2x512xf32>
    %7 = arith.truncf %6 : vector<2x512xf32> to vector<2x512xbf16>
    %8 = vector.extract_strided_slice %7 {offsets = [0, 0], sizes = [2, 256], strides = [1, 1]} : vector<2x512xbf16> to vector<2x256xbf16>
    %9 = vector.extract_strided_slice %7 {offsets = [0, 256], sizes = [2, 256], strides = [1, 1]} : vector<2x512xbf16> to vector<2x256xbf16>
    %10 = arith.negf %9 : vector<2x256xbf16>
    %11 = math.exp %10 : vector<2x256xbf16>
    %cst_5 = arith.constant 1.000000e+00 : bf16
    %12 = vector.broadcast %cst_5 : bf16 to vector<2x256xbf16>
    %13 = arith.addf %12, %11 : vector<2x256xbf16>
    %14 = arith.divf %12, %13 : vector<2x256xbf16>
    %15 = arith.mulf %8, %14 : vector<2x256xbf16>
    %c0_6 = arith.constant 0 : index
    %c0_7 = arith.constant 0 : index
    %16 = vector.load %arg4[%c0_6, %c0_7] : memref<2x256xbf16, #tpu.memory_space<vmem>>, vector<2x256xbf16>
    tpu.vector_store %arg4[%c0_6, %c0_7], %15 {strides = array<i32>} : memref<2x256xbf16, #tpu.memory_space<vmem>>, vector<2x256xbf16>,
    return
  }
  func.func @transform_0(%arg0: i32) -> (i32, i32) {
    %c0_i32 = arith.constant 0 : i32
    %c0_i32_0 = arith.constant 0 : i32
    return %arg0, %c0_i32 : i32, i32
  }
  func.func @transform_1(%arg0: i32) -> (i32, i32) {
    %c0_i32 = arith.constant 0 : i32
    %c0_i32_0 = arith.constant 0 : i32
    %c0_i32_1 = arith.constant 0 : i32
    return %c0_i32, %c0_i32_0 : i32, i32
  }
  func.func @transform_2(%arg0: i32) -> (i32, i32) {
    %c0_i32 = arith.constant 0 : i32
    %c0_i32_0 = arith.constant 0 : i32
    %c0_i32_1 = arith.constant 0 : i32
    return %c0_i32, %c0_i32_0 : i32, i32
  }
  func.func @transform_3(%arg0: i32) -> (i32, i32) {
    %c0_i32 = arith.constant 0 : i32
    %c0_i32_0 = arith.constant 0 : i32
    return %arg0, %c0_i32 : i32, i32
  }
}

</mosaic_0001>

<llo_original>
// kernel: tpu_custom_call.1
$region0: #{tpu_custom_call.1}
  #allocation0 [shape = 'u32[]', space=smem, size = 0x4, offset = 0x4, fixed_abs, tag = 'smem constant byte address 0x4 - core index']
  #allocation1 [shape = 'u32[144,128]{1,0:T(1,128)}', space=vmem, size = 0x12000, scoped, tag = 'internal scratch']
  %s0 = inlined_call_operand.hbm [shape: f32[2,32], index: 0, kind: input, shape index: {}]
  %s1 = inlined_call_operand.hbm [shape: bf16[32,512], index: 1, kind: input, shape index: {}]
  %s2 = inlined_call_operand.vmem [shape: f32[1,512], index: 2, kind: input, shape index: {}]
  %s3 = inlined_call_operand.hbm [shape: bf16[2,256], index: 3, kind: output, shape index: {}]
  %s4 = sld [smem:[#allocation0]]
  $region30: #{tpu_custom_call.1} parent=0
    _
  %s6 = ssub.s32 1, %s4
  %s7 = scalar_select 0, %s6, %s4
  $region1: #{tpu_custom_call.1} parent=0
    #allocation2 [shape = 'u8[1024]{0}', space=vmem, size = 0x400, scoped, tag = 'input window, operand 0, single buffered']
    #allocation3 [shape = 's32[1]{0}', space=sflag, size = 0x4, scoped, tag = 'scoped memory for tpu_custom_call.1']
    #allocation4 [shape = 's32[1]{0}', space=sflag, size = 0x4, scoped, tag = 'scoped memory for tpu_custom_call.1']
    #allocation5 [shape = 'u8[32768]{0}', space=vmem, size = 0x8000, scoped, tag = 'input window, operand 1, single buffered']
    #allocation6 [shape = 's32[1]{0}', space=sflag, size = 0x4, scoped, tag = 'scoped memory for tpu_custom_call.1']
    #allocation7 [shape = 'u8[1024]{0}', space=vmem, size = 0x400, scoped, tag = 'output window, operand 0, single buffered']
    %8 = vsyncpa [#allocation3], 0
    %9 = vsyncpa [#allocation6], 0
    %10 = vsyncpa [#allocation4], 0
    // Predicated region
    $region2: #{tpu_custom_call.1} parent=1 // pred_check
      _
    $region3: #{tpu_custom_call.1} parent=1 // pred_check_branch
      %12 = sbr.rel (0) target = $region5
    $region4: #{tpu_custom_call.1} parent=1 // pred_region
      %s14 = ssub.s32 32, 32
      %15 = vsyncadd [#allocation3], %s14
      %s17 = sshll.u32 [#allocation2], 4
      %s18 = int_to_ptr.vmem [resolvable:$true] %s17
      %20 = dma.hbm_to_vmem [thread:$0]  %s0, 32, %s18, [#allocation3]
    $region5: #{tpu_custom_call.1} parent=1 // pred_fallthru
      _
    // Predicated region
    $region6: #{tpu_custom_call.1} parent=1 // pred_check
      _
    $region7: #{tpu_custom_call.1} parent=1 // pred_check_branch
      %22 = sbr.rel (0) target = $region9
    $region8: #{tpu_custom_call.1} parent=1 // pred_region
      %s24 = ssub.s32 1024, 1024
      %25 = vsyncadd [#allocation6], %s24
      %s26 = sshll.u32 [#allocation5], 4
      %s27 = int_to_ptr.vmem [resolvable:$true] %s26
      %32 = dma.hbm_to_vmem [thread:$0]  %s1, 1024, %s27, [#allocation6], 256, 256, 16
    $region9: #{tpu_custom_call.1} parent=1 // pred_fallthru
      _
    // Predicated region
    $region10: #{tpu_custom_call.1} parent=1 // pred_check
      _
    $region11: #{tpu_custom_call.1} parent=1 // pred_check_branch
      %34 = sbr.rel (0) target = $region13
    $region12: #{tpu_custom_call.1} parent=1 // pred_region
      _
    $region13: #{tpu_custom_call.1} parent=1 // pred_fallthru
      _
    // Predicated region
    $region14: #{tpu_custom_call.1} parent=1 // pred_check
      _
    $region15: #{tpu_custom_call.1} parent=1 // pred_check_branch
      %36 = sbr.rel (0) target = $region17
    $region16: #{tpu_custom_call.1} parent=1 // pred_region
      %37 = dma.done [#allocation3], 32
    $region17: #{tpu_custom_call.1} parent=1 // pred_fallthru
      _
    // Predicated region
    $region18: #{tpu_custom_call.1} parent=1 // pred_check
      _
    $region19: #{tpu_custom_call.1} parent=1 // pred_check_branch
      %39 = sbr.rel (0) target = $region21
    $region20: #{tpu_custom_call.1} parent=1 // pred_region
      %40 = dma.done [#allocation6], 1024
    $region21: #{tpu_custom_call.1} parent=1 // pred_fallthru
      _
    %v43 = vld [vmem:[#allocation2] sm:$0x3]
    %v44 = vpack.c.bf16 %v43, %v43
    %v45 = vld [vmem:[#allocation5] sm:$0xff]
    %v46 = vld [vmem:[#allocation5 + $0x8] sm:$0xff]
    %v47 = vld [vmem:[#allocation5 + $0x10] sm:$0xff]
    %v48 = vld [vmem:[#allocation5 + $0x18] sm:$0xff]
    %v49 = vld [vmem:[#allocation5 + $0x20] sm:$0xff]
    %v50 = vld [vmem:[#allocation5 + $0x28] sm:$0xff]
    %v51 = vld [vmem:[#allocation5 + $0x30] sm:$0xff]
    %v52 = vld [vmem:[#allocation5 + $0x38] sm:$0xff]
    %v53 = vld [vmem:[%s2] sm:$0xf]
    %v55 = vlaneseq
    %v56 = vshrl.u32 %v55, 7
    %v57 = vsub.s32 0, %v56
    %v58 = vrot.slane %v53, %v57
    %v59 = vlaneseq
    %v60 = vshrl.u32 %v59, 7
    %v61 = vsub.s32 1, %v60
    %v62 = vrot.slane %v53, %v61
    %v63 = vlaneseq
    %v64 = vshrl.u32 %v63, 7
    %v65 = vsub.s32 2, %v64
    %v66 = vrot.slane %v53, %v65
    %v67 = vlaneseq
    %v68 = vshrl.u32 %v67, 7
    %v69 = vsub.s32 3, %v68
    %v70 = vrot.slane %v53, %v69
    %v83 = vunpack.c.l.b16 %v45
    %v84 = vunpack.c.h.b16 %v45
    %v85 = vunpack.c.l.b16 %v46
    %v86 = vunpack.c.h.b16 %v46
    %v87 = vunpack.c.l.b16 %v47
    %v88 = vunpack.c.h.b16 %v47
    %v89 = vunpack.c.l.b16 %v48
    %v90 = vunpack.c.h.b16 %v48
    %v91 = vunpack.c.l.b16 %v49
    %v92 = vunpack.c.h.b16 %v49
    %v93 = vunpack.c.l.b16 %v50
    %v94 = vunpack.c.h.b16 %v50
    %v95 = vunpack.c.l.b16 %v51
    %v96 = vunpack.c.h.b16 %v51
    %v97 = vunpack.c.l.b16 %v52
    %v98 = vunpack.c.h.b16 %v52
    %v99 = vpack.c.b16 %v87, %v83
    %v100 = vpack.c.b16 %v88, %v84
    %v101 = vpack.c.b16 %v89, %v85
    %v102 = vpack.c.b16 %v90, %v86
    %v103 = vpack.c.b16 %v95, %v91
    %v104 = vpack.c.b16 %v96, %v92
    %v105 = vpack.c.b16 %v97, %v93
    %v106 = vpack.c.b16 %v98, %v94
    %vm115 = vcmask 261120
    %v117 = vsel %vm115, %v44, 0
    %119 = vmatprep.subr.bf16.mxu0 %v100
    %120 = vmatpush1.bf16.msra.mxu0 %v99
    %121 = vmatprep.subr.bf16.mxu0 %v104
    %122 = vmatpush1.bf16.msra.mxu0 %v103
    %123 = vmatprep.subr.bf16.mxu0 0
    %124 = vmatpush1.bf16.msra.mxu0 0
    %125 = vmatprep.subr.bf16.mxu0 0
    %126 = vmatpush1.bf16.msra.mxu0 0
    %127 = vmatprep.subr.bf16.mxu0 0
    %128 = vmatpush1.bf16.msra.mxu0 0
    %129 = vmatprep.subr.bf16.mxu0 0
    %130 = vmatpush1.bf16.msra.mxu0 0
    %131 = vmatprep.subr.bf16.mxu0 0
    %132 = vmatpush1.bf16.msra.mxu0 0
    %133 = vmatprep.subr.bf16.mxu0 0
    %134 = vmatpush1.bf16.msra.mxu0 0
    %135 = vmatprep.subr.bf16.mxu0 0
    %136 = vmatpush1.bf16.msra.mxu0 0
    %137 = vmatprep.subr.bf16.mxu0 0
    %138 = vmatpush1.bf16.msra.mxu0 0
    %139 = vmatprep.subr.bf16.mxu0 0
    %140 = vmatpush1.bf16.msra.mxu0 0
    %141 = vmatprep.subr.bf16.mxu0 0
    %142 = vmatpush1.bf16.msra.mxu0 0
    %143 = vmatprep.subr.bf16.mxu0 0
    %144 = vmatpush1.bf16.msra.mxu0 0
    %145 = vmatprep.subr.bf16.mxu0 0
    %146 = vmatpush1.bf16.msra.mxu0 0
    %147 = vmatprep.subr.bf16.mxu0 0
    %148 = vmatpush1.bf16.msra.mxu0 0
    %149 = vmatprep.subr.bf16.mxu0 0
    %150 = vmatpush1.bf16.msra.mxu0 0
    %151 = vmatprep.mubr.bf16.mxu0 0
    %152 = vmatmul.mubr.bf16.gmra.mrb[0].mxu0 %v117
    %v153 = vpop.f32.mrb[0].mxu0
    %v154 = vadd.f32 %v58, %v153
    %v155 = vpop.f32.mrb[0].mxu0
    %v156 = vadd.f32 %v62, %v155
    %v157 = vpop.f32.mrb[0].mxu0
    %v158 = vpop.f32.mrb[0].mxu0
    %159 = vdwg.mxu0
    %160 = vmatprep.subr.bf16.mxu0 %v102
    %161 = vmatpush1.bf16.msra.mxu0 %v101
    %162 = vmatprep.subr.bf16.mxu0 %v106
    %163 = vmatpush1.bf16.msra.mxu0 %v105
    %164 = vmatprep.subr.bf16.mxu0 0
    %165 = vmatpush1.bf16.msra.mxu0 0
    %166 = vmatprep.subr.bf16.mxu0 0
    %167 = vmatpush1.bf16.msra.mxu0 0
    %168 = vmatprep.subr.bf16.mxu0 0
    %169 = vmatpush1.bf16.msra.mxu0 0
    %170 = vmatprep.subr.bf16.mxu0 0
    %171 = vmatpush1.bf16.msra.mxu0 0
    %172 = vmatprep.subr.bf16.mxu0 0
    %173 = vmatpush1.bf16.msra.mxu0 0
    %174 = vmatprep.subr.bf16.mxu0 0
    %175 = vmatpush1.bf16.msra.mxu0 0
    %176 = vmatprep.subr.bf16.mxu0 0
    %177 = vmatpush1.bf16.msra.mxu0 0
    %178 = vmatprep.subr.bf16.mxu0 0
    %179 = vmatpush1.bf16.msra.mxu0 0
    %180 = vmatprep.subr.bf16.mxu0 0
    %181 = vmatpush1.bf16.msra.mxu0 0
    %182 = vmatprep.subr.bf16.mxu0 0
    %183 = vmatpush1.bf16.msra.mxu0 0
    %184 = vmatprep.subr.bf16.mxu0 0
    %185 = vmatpush1.bf16.msra.mxu0 0
    %186 = vmatprep.subr.bf16.mxu0 0
    %187 = vmatpush1.bf16.msra.mxu0 0
    %188 = vmatprep.subr.bf16.mxu0 0
    %189 = vmatpush1.bf16.msra.mxu0 0
    %190 = vmatprep.subr.bf16.mxu0 0
    %191 = vmatpush1.bf16.msra.mxu0 0
    %192 = vmatprep.mubr.bf16.mxu0 0
    %193 = vmatmul.mubr.bf16.gmra.mrb[0].mxu0 %v117
    %v194 = vpop.f32.mrb[0].mxu0
    %v195 = vadd.f32 %v66, %v194
    %v196 = vpop.f32.mrb[0].mxu0
    %v197 = vadd.f32 %v70, %v196
    %v198 = vpop.f32.mrb[0].mxu0
    %v199 = vpop.f32.mrb[0].mxu0
    %200 = vdwg.mxu0
    %v201 = vpack.c.bf16 %v154, %v154
    %v202 = vpack.c.bf16 %v156, %v156
    %v203 = vpack.c.bf16 %v195, %v195
    %v204 = vpack.c.bf16 %v197, %v197
    %v205 = vxor.u32 %v203, 2147516416
    %v206 = vxor.u32 %v204, 2147516416
    %v208 = vmul.bf16 %v205, 1069105081
    %v209 = vpow.bf16.pop %v208
    %v211 = vmul.bf16 %v206, 1069105081
    %v212 = vpow.bf16.pop %v211
    %v213 = vadd.bf16 %v209, 1065369472
    %v214 = vadd.bf16 %v212, 1065369472
    %v215 = vrcp.bf16.pop %v213
    %v216 = vmul.bf16 1065369472, %v215
    %v217 = vrcp.bf16.pop %v214
    %v218 = vmul.bf16 1065369472, %v217
    %v219 = vmul.bf16 %v201, %v216
    %v220 = vmul.bf16 %v202, %v218
    %v223 = vcombine.low %v219, %v220
    %v225 = vunpack.c.l.s4 1966171168
    %v226 = vunpack.c.0.s8 %v225
    %v227 = vlaneseq
    %v228 = vshrl.u32 %v227, 7
    %v229 = vsub.s32 %v226, %v228
    %v230 = vrot.slane %v223, %v229
    %v232 = vunpack.c.l.s4 1966171168
    %v233 = vunpack.c.0.s8 %v232
    %v234 = vlaneseq
    %v235 = vshrl.u32 %v234, 7
    %v236 = vsub.s32 %v233, %v235
    %v237 = vrot.slane %v230, %v236
    %239 = vst [vmem:[#allocation7] sm:$0x3] %v237
    // Predicated region
    $region22: #{tpu_custom_call.1} parent=1 // pred_check
      _
    $region23: #{tpu_custom_call.1} parent=1 // pred_check_branch
      %241 = sbr.rel (0) target = $region25
    $region24: #{tpu_custom_call.1} parent=1 // pred_region
      %s243 = ssub.s32 32, 32
      %244 = vsyncadd [#allocation4], %s243
      %s246 = sshll.u32 [#allocation7], 4
      %s247 = int_to_ptr.vmem [resolvable:$true] %s246
      %249 = dma.vmem_to_hbm [thread:$0]  %s247, 32, %s3, [#allocation4]
    $region25: #{tpu_custom_call.1} parent=1 // pred_fallthru
      _
    // Predicated region
    $region26: #{tpu_custom_call.1} parent=1 // pred_check
      _
    $region27: #{tpu_custom_call.1} parent=1 // pred_check_branch
      %251 = sbr.rel (0) target = $region29
    $region28: #{tpu_custom_call.1} parent=1 // pred_region
      %252 = dma.done [#allocation4], 32
    $region29: #{tpu_custom_call.1} parent=1 // pred_fallthru
      _
    %253 = vsyncpa [#allocation3], 1
    %254 = vsyncpa [#allocation6], 1
    %255 = vsyncpa [#allocation4], 1

</llo_original>
